<compile_context>
chip_gen: v5e
topology: v5e:2x2
jax: 0.10.0
libtpu: 0.0.40
codegen_flags: <defaults>
</compile_context>

<pallas_src>
import functools
import math

import jax
import jax.numpy as jnp
from jax import lax
from jax.experimental import pallas as pl
from jax.experimental.pallas import tpu as pltpu


_MASK_VALUE = -1e30  # large finite negative: no NaN even for fully-masked rows


def _sdpa_kernel(*refs, inv_sqrt_e, use_weight, use_mask, mxu_dtype):
    """One (batch, q-tile) grid step.

    refs: q (1,TQ,E), k (1,Sk,E), v (1,Sk,E), [mask (1,TQ,Sk) int8],
          [w (E,E)], out (1,TQ,E), scores (1,TQ,Sk)
    """
    idx = 0
    q_ref = refs[idx]; idx += 1
    k_ref = refs[idx]; idx += 1
    v_ref = refs[idx]; idx += 1
    mask_ref = None
    if use_mask:
        mask_ref = refs[idx]; idx += 1
    w_ref = None
    if use_weight:
        w_ref = refs[idx]; idx += 1
    out_ref = refs[idx]; idx += 1
    scores_ref = refs[idx]

    # MXU feed dtype: native input dtype unless the caller opts into bf16.
    cdt = jnp.dtype(mxu_dtype) if mxu_dtype is not None else k_ref.dtype

    k = k_ref[0].astype(cdt)                   # (Sk, E)
    v = v_ref[0].astype(cdt)                   # (Sk, E)

    # Fold 1/sqrt(E) into q: O(TQ*E) work instead of O(TQ*Sk).
    q = (q_ref[0] * inv_sqrt_e).astype(cdt)
    if use_weight:
        # Optional projection q @ w on the MXU, f32 accumulation.
        q = lax.dot(q, w_ref[...].astype(cdt),
                    preferred_element_type=jnp.float32).astype(cdt)

    # scores = q @ k^T without materializing a transpose (MXU handles it).
    s = lax.dot_general(q, k, (((1,), (1,)), ((), ())),
                        preferred_element_type=jnp.float32)    # (TQ, Sk) f32

    if use_mask:
        s = jnp.where(mask_ref[0] != 0, _MASK_VALUE, s)

    # Row-wise softmax in f32; exact reciprocal so returned rows sum to 1
    # (scores are a user-visible output of this module).
    m = jnp.max(s, axis=-1, keepdims=True)
    e = jnp.exp(s - m)
    denom = jnp.sum(e, axis=-1, keepdims=True)
    p = e * pl.reciprocal(denom, approx=False)

    scores_ref[0] = p.astype(scores_ref.dtype)
    out_ref[0] = lax.dot(p.astype(cdt), v,
                         preferred_element_type=jnp.float32
                         ).astype(out_ref.dtype)


def _vmem_and_cores():
    """Physical per-core VMEM plus a TensorCore-count heuristic.

    v5e/v6e: 128 MiB VMEM, 1 TC/chip.  v7x-class: 64 MiB VMEM, 2 TC/chip.
    """
    vmem = 128 * 1024 * 1024
    try:
        vmem = int(pltpu.get_tpu_info().vmem_capacity_bytes)
    except Exception:
        pass
    cores = 2 if vmem <= 64 * 1024 * 1024 else 1
    return vmem, cores


def _choose_block_q(Sq, Sk, E, in_bytes, out_bytes, scores_bytes,
                    use_mask, use_weight, tile_budget, B, num_cores,
                    kv_buffers):
    """Largest MXU-friendly Sq tile whose per-step VMEM footprint fits."""
    # Resident per-batch k and v (+ w), kv_buffers deep.
    fixed = kv_buffers * 2 * Sk * E * in_bytes
    if use_weight:
        fixed += kv_buffers * E * E * in_bytes
    # Per q-row cost of one grid step.
    per_row = (2 * E * in_bytes                           # q (double-buffered)
               + 2 * E * out_bytes                        # out
               + 2 * Sk * scores_bytes                    # scores writeback
               + (2 * Sk if use_mask else 0)              # int8 mask
               + 3 * Sk * 4)                              # f32 temporaries
    avail = tile_budget - fixed
    if avail < 32 * per_row:
        # Full-Sk residency barely fits on this chip.
        # TODO(synk): add an Sk grid axis + online softmax for long context.
        cap = 32
    else:
        cap = avail // per_row
    cap = min(int(cap), 1024, Sq)

    # Keep >= 2 q-tiles per TensorCore of parallel grid work (v7x megacore).
    min_tiles = -(-2 * num_cores // max(1, B))
    if min_tiles > 1:
        cap = min(cap, -(-Sq // min_tiles))

    if cap >= Sq:
        return Sq

    align = 32 if use_mask else 8      # int8 mask tiles want 32-row sublanes
    cap = max(align, int(cap))

    # Prefer a 128-aligned divisor of Sq (full MXU passes, no padded last
    # tile); else an aligned divisor close to the cap; else plain 128/align
    # rounding of the cap.
    best_div = 0
    for d in range(cap, align - 1, -1):
        if Sq % d == 0 and d % align == 0:
            if d % 128 == 0:
                return d
            if best_div == 0:
                best_div = d
    aligned128 = (cap // 128) * 128
    if best_div >= max(128, aligned128 // 2):
        return best_div
    if aligned128 >= 128:
        return aligned128
    return max(align, (cap // align) * align)


def _resident_spec(block_shape, index_map, single_buffer):
    """BlockSpec for an array whose index_map is constant along the inner Sq
    axis; on VMEM-tight chips request a single buffer (no double-buffering)."""
    if single_buffer and hasattr(pl, "Buffered"):
        try:
            return pl.BlockSpec(block_shape, index_map,
                                pipeline_mode=pl.Buffered(1))
        except TypeError:      # BlockSpec without pipeline_mode support
            pass
    return pl.BlockSpec(block_shape, index_map)


def scaled_dot_product_attention(query, key, value, mask=None, w=None, *,
                                 embed_dim=None, scores_dtype=None,
                                 mxu_dtype=None, block_q=None,
                                 vmem_limit_bytes=None):
    """Returns (attn_output, attn_scores), matching the torch module forward.

    Best MXU utilization when E and Sk are multiples of 128 (256 on v6e/v7x).
    Pass the mask as int8/uint8 to avoid a conversion pass over HBM.
    """
    B, Sq, E = query.shape
    Bk, Sk, Ek = key.shape
    assert key.shape == value.shape and Bk == B and Ek == E
    if embed_dim is None:
        embed_dim = E
    use_weight = w is not None
    use_mask = mask is not None
    out_dtype = query.dtype
    scr_dtype = jnp.dtype(scores_dtype) if scores_dtype is not None else out_dtype

    vmem_phys, num_cores = _vmem_and_cores()
    if vmem_limit_bytes is None:
        # ~96 MiB on 128 MiB chips (v5e/v6e), ~48 MiB on 64 MiB chips (v7x).
        vmem_limit_bytes = int(vmem_phys * 0.75)
    single_buffer_kv = vmem_phys <= 64 * 1024 * 1024   # v7x-class

    if use_mask and mask.dtype not in (jnp.int8, jnp.uint8):
        # Accepted as-is when already 8-bit; otherwise one conversion pass.
        mask = mask.astype(jnp.int8)

    in_bytes = jnp.dtype(query.dtype).itemsize
    if block_q is None:
        block_q = _choose_block_q(
            Sq, Sk, E, in_bytes, jnp.dtype(out_dtype).itemsize,
            jnp.dtype(scr_dtype).itemsize, use_mask, use_weight,
            tile_budget=int(vmem_limit_bytes * 0.8), B=B, num_cores=num_cores,
            kv_buffers=1 if single_buffer_kv else 2)
    n_q = pl.cdiv(Sq, block_q)

    kernel = functools.partial(
        _sdpa_kernel,
        inv_sqrt_e=1.0 / math.sqrt(embed_dim),
        use_weight=use_weight,
        use_mask=use_mask,
        mxu_dtype=mxu_dtype)

    in_specs = [
        pl.BlockSpec((1, block_q, E), lambda b, i: (b, i, 0)),           # q tile
        _resident_spec((1, Sk, E), lambda b, i: (b, 0, 0), single_buffer_kv),
        _resident_spec((1, Sk, E), lambda b, i: (b, 0, 0), single_buffer_kv),
    ]
    args = [query, key, value]
    if use_mask:
        in_specs.append(pl.BlockSpec((1, block_q, Sk), lambda b, i: (b, i, 0)))
        args.append(mask)
    if use_weight:
        in_specs.append(
            _resident_spec((E, E), lambda b, i: (0, 0), single_buffer_kv))
        args.append(w.astype(query.dtype))

    out_shape = (
        jax.ShapeDtypeStruct((B, Sq, E), out_dtype),
        jax.ShapeDtypeStruct((B, Sq, Sk), scr_dtype),
    )
    out_specs = [
        pl.BlockSpec((1, block_q, E), lambda b, i: (b, i, 0)),
        pl.BlockSpec((1, block_q, Sk), lambda b, i: (b, i, 0)),
    ]

    return pl.pallas_call(
        kernel,
        out_shape=out_shape,
        grid_spec=pltpu.PrefetchScalarGridSpec(
            num_scalar_prefetch=0,
            grid=(B, n_q),
            in_specs=in_specs,
            out_specs=out_specs),
        compiler_params=pltpu.CompilerParams(
            dimension_semantics=("parallel", "parallel"),
            vmem_limit_bytes=vmem_limit_bytes),
    )(*args)


def _reference(query, key, value, mask, w, embed_dim):
    q = query.astype(jnp.float32)
    if w is not None:
        q = q @ w.astype(jnp.float32)
    scores = jnp.einsum("bqe,bke->bqk", q, key.astype(jnp.float32))
    scores = scores / math.sqrt(embed_dim)
    if mask is not None:
        scores = jnp.where(mask != 0, -jnp.inf, scores)
    scores = jax.nn.softmax(scores, axis=-1)
    out = jnp.einsum("bqk,bke->bqe", scores, value.astype(jnp.float32))
    return out, scores


if __name__ == "__main__":
    key0 = jax.random.PRNGKey(0)

    # --- Case 1: small shapes, int8 mask + projection weight ---------------
    B, Sq, Sk, E = 2, 8, 8, 32
    kq, kk, kv, kw, km = jax.random.split(key0, 5)
    query = jax.random.normal(kq, (B, Sq, E), jnp.float32)
    key_t = jax.random.normal(kk, (B, Sk, E), jnp.float32)
    value = jax.random.normal(kv, (B, Sk, E), jnp.float32)
    w = jax.random.normal(kw, (E, E), jnp.float32)   # nn.Parameter(randn(E,E))
    mask = jax.random.bernoulli(km, 0.2, (B, Sq, Sk)).astype(jnp.int8)
    mask = mask.at[:, :, 0].set(0)                   # keep >=1 unmasked per row

    out, scores = scaled_dot_product_attention(
        query, key_t, value, mask=mask, w=w, embed_dim=E)
    jax.block_until_ready((out, scores))
    ref_out, ref_scores = _reference(query, key_t, value, mask, w, E)
    assert jnp.allclose(out, ref_out, atol=5e-3, rtol=5e-3)
    assert jnp.allclose(scores, ref_scores, atol=2e-3, rtol=2e-3)

    # --- Case 2: Sq tiling path, module-faithful precision ------------------
    B2, Sq2, Sk2, E2 = 2, 320, 128, 128
    kq2, kk2, kv2 = jax.random.split(jax.random.PRNGKey(1), 3)
    q2 = jax.random.normal(kq2, (B2, Sq2, E2), jnp.float32)
    k2 = jax.random.normal(kk2, (B2, Sk2, E2), jnp.float32)
    v2 = jax.random.normal(kv2, (B2, Sk2, E2), jnp.float32)

    out2, scores2 = scaled_dot_product_attention(q2, k2, v2, embed_dim=E2)
    jax.block_until_ready((out2, scores2))
    ref_out2, ref_scores2 = _reference(q2, k2, v2, None, None, E2)
    assert jnp.allclose(out2, ref_out2, atol=5e-3, rtol=5e-3)
    assert jnp.allclose(scores2, ref_scores2, atol=2e-3, rtol=2e-3)

    # --- Case 3: opt-in bf16 MXU feeds + bf16 scores writeback --------------
    out3, scores3 = scaled_dot_product_attention(
        q2, k2, v2, embed_dim=E2,
        mxu_dtype=jnp.bfloat16, scores_dtype=jnp.bfloat16)
    jax.block_until_ready((out3, scores3))
    assert jnp.allclose(out3, ref_out2, atol=2e-2, rtol=2e-2)
    assert jnp.allclose(scores3.astype(jnp.float32), ref_scores2,
                        atol=2e-2, rtol=2e-2)

    print("KERNEL_OK")
</pallas_src>

<mosaic_0001>
module attributes {stable_mosaic.version = 11 : i64} {
  func.func @_sdpa_kernel(%arg0: i32, %arg1: i32, %arg2: memref<1x8x32xf32, #tpu.memory_space<vmem>>, %arg3: memref<1x8x32xf32, #tpu.memory_space<vmem>>, %arg4: memref<1x8x32xf32, #tpu.memory_space<vmem>>, %arg5: memref<1x8x8xi8, #tpu.memory_space<vmem>>, %arg6: memref<32x32xf32, #tpu.memory_space<vmem>>, %arg7: memref<1x8x32xf32, #tpu.memory_space<vmem>>, %arg8: memref<1x8x8xf32, #tpu.memory_space<vmem>>) attributes {dimension_semantics = [#tpu.dimension_semantics<parallel>, #tpu.dimension_semantics<parallel>], iteration_bounds = array<i64: 2, 1>, scalar_prefetch = 0 : i64, scratch_operands = 0 : i64, tpu.core_type = #tpu.core_type<tc>, window_params = [{transform_indices = @transform_0, window_bounds = array<i64: 1, 8, 32>}, {transform_indices = @transform_1, window_bounds = array<i64: 1, 8, 32>}, {transform_indices = @transform_2, window_bounds = array<i64: 1, 8, 32>}, {transform_indices = @transform_3, window_bounds = array<i64: 1, 8, 8>}, {pipeline_mode = #tpu.pipeline_mode<synchronous>, transform_indices = @transform_4, window_bounds = array<i64: 32, 32>}, {transform_indices = @transform_5, window_bounds = array<i64: 1, 8, 32>}, {transform_indices = @transform_6, window_bounds = array<i64: 1, 8, 8>}]} {
    %c0 = arith.constant 0 : index
    %c0_0 = arith.constant 0 : index
    %c0_1 = arith.constant 0 : index
    %0 = vector.load %arg3[%c0, %c0_0, %c0_1] : memref<1x8x32xf32, #tpu.memory_space<vmem>>, vector<1x8x32xf32>
    %1 = vector.shape_cast %0 : vector<1x8x32xf32> to vector<8x32xf32>
    %c0_2 = arith.constant 0 : index
    %c0_3 = arith.constant 0 : index
    %c0_4 = arith.constant 0 : index
    %2 = vector.load %arg4[%c0_2, %c0_3, %c0_4] : memref<1x8x32xf32, #tpu.memory_space<vmem>>, vector<1x8x32xf32>
    %3 = vector.shape_cast %2 : vector<1x8x32xf32> to vector<8x32xf32>
    %c0_5 = arith.constant 0 : index
    %c0_6 = arith.constant 0 : index
    %c0_7 = arith.constant 0 : index
    %4 = vector.load %arg2[%c0_5, %c0_6, %c0_7] : memref<1x8x32xf32, #tpu.memory_space<vmem>>, vector<1x8x32xf32>
    %5 = vector.shape_cast %4 : vector<1x8x32xf32> to vector<8x32xf32>
    %cst = arith.constant 0.176776692 : f32
    %6 = vector.broadcast %cst : f32 to vector<8x32xf32>
    %7 = arith.mulf %5, %6 : vector<8x32xf32>
    %c0_8 = arith.constant 0 : index
    %c0_9 = arith.constant 0 : index
    %8 = vector.load %arg6[%c0_8, %c0_9] : memref<32x32xf32, #tpu.memory_space<vmem>>, vector<32x32xf32>
    %cst_10 = arith.constant dense<0.000000e+00> : vector<8x32xf32>
    %9 = tpu.matmul %7, %8, %cst_10 {dimension_numbers = #tpu.dot_dimension_numbers<[1], [0], [0], [1], [0, 0, 1, 1], [], []>} : vector<8x32xf32>, vector<32x32xf32>, vector<8x32xf32> -> vector<8x32xf32>
    %cst_11 = arith.constant dense<0.000000e+00> : vector<8x8xf32>
    %10 = tpu.matmul %9, %1, %cst_11 {dimension_numbers = #tpu.dot_dimension_numbers<[1], [1], [0], [0], [0, 0, 1, 0], [], []>} : vector<8x32xf32>, vector<8x32xf32>, vector<8x8xf32> -> vector<8x8xf32>
    %c0_12 = arith.constant 0 : index
    %c0_13 = arith.constant 0 : index
    %c0_14 = arith.constant 0 : index
    %11 = vector.load %arg5[%c0_12, %c0_13, %c0_14] : memref<1x8x8xi8, #tpu.memory_space<vmem>>, vector<1x8x8xi8>
    %12 = vector.shape_cast %11 : vector<1x8x8xi8> to vector<8x8xi8>
    %c0_i8 = arith.constant 0 : i8
    %13 = vector.broadcast %c0_i8 : i8 to vector<8x8xi8>
    %14 = arith.cmpi ne, %12, %13 : vector<8x8xi8>
    %cst_15 = arith.constant -1.000000e+30 : f32
    %15 = vector.broadcast %cst_15 : f32 to vector<8x8xf32>
    %16 = arith.select %14, %15, %10 : vector<8x8xi1>, vector<8x8xf32>
    %cst_16 = arith.constant dense<0xFF800000> : vector<8xf32>
    %17 = vector.multi_reduction <maximumf>, %16, %cst_16 [1] : vector<8x8xf32> to vector<8xf32>
    %18 = vector.shape_cast %17 : vector<8xf32> to vector<8x1xf32>
    %19 = vector.broadcast %18 : vector<8x1xf32> to vector<8x8xf32>
    %20 = arith.subf %16, %19 : vector<8x8xf32>
    %21 = math.exp %20 : vector<8x8xf32>
    %cst_17 = arith.constant dense<0.000000e+00> : vector<8xf32>
    %22 = vector.multi_reduction <add>, %21, %cst_17 [1] : vector<8x8xf32> to vector<8xf32>
    %23 = vector.shape_cast %22 : vector<8xf32> to vector<8x1xf32>
    %24 = tpu.reciprocal %23 : vector<8x1xf32> -> vector<8x1xf32>
    %25 = vector.broadcast %24 : vector<8x1xf32> to vector<8x8xf32>
    %26 = arith.mulf %21, %25 : vector<8x8xf32>
    %c0_18 = arith.constant 0 : index
    %c0_19 = arith.constant 0 : index
    %c0_20 = arith.constant 0 : index
    %27 = vector.load %arg8[%c0_18, %c0_19, %c0_20] : memref<1x8x8xf32, #tpu.memory_space<vmem>>, vector<1x8x8xf32>
    %28 = vector.shape_cast %27 : vector<1x8x8xf32> to vector<8x8xf32>
    %29 = vector.shape_cast %26 : vector<8x8xf32> to vector<1x8x8xf32>
    tpu.vector_store %arg8[%c0_18, %c0_19, %c0_20], %29 {strides = array<i32>} : memref<1x8x8xf32, #tpu.memory_space<vmem>>, vector<1x8x8xf32>,
    %cst_21 = arith.constant dense<0.000000e+00> : vector<8x32xf32>
    %30 = tpu.matmul %26, %3, %cst_21 {dimension_numbers = #tpu.dot_dimension_numbers<[1], [0], [0], [1], [0, 0, 1, 1], [], []>} : vector<8x8xf32>, vector<8x32xf32>, vector<8x32xf32> -> vector<8x32xf32>
    %c0_22 = arith.constant 0 : index
    %c0_23 = arith.constant 0 : index
    %c0_24 = arith.constant 0 : index
    %31 = vector.load %arg7[%c0_22, %c0_23, %c0_24] : memref<1x8x32xf32, #tpu.memory_space<vmem>>, vector<1x8x32xf32>
    %32 = vector.shape_cast %31 : vector<1x8x32xf32> to vector<8x32xf32>
    %33 = vector.shape_cast %30 : vector<8x32xf32> to vector<1x8x32xf32>
    tpu.vector_store %arg7[%c0_22, %c0_23, %c0_24], %33 {strides = array<i32>} : memref<1x8x32xf32, #tpu.memory_space<vmem>>, vector<1x8x32xf32>,
    return
  }
  func.func @transform_0(%arg0: i32, %arg1: i32) -> (i32, i32, i32) {
    %c0_i32 = arith.constant 0 : i32
    %c0_i32_0 = arith.constant 0 : i32
    return %arg0, %arg1, %c0_i32 : i32, i32, i32
  }
  func.func @transform_1(%arg0: i32, %arg1: i32) -> (i32, i32, i32) {
    %c0_i32 = arith.constant 0 : i32
    %c0_i32_0 = arith.constant 0 : i32
    %c0_i32_1 = arith.constant 0 : i32
    return %arg0, %c0_i32, %c0_i32_0 : i32, i32, i32
  }
  func.func @transform_2(%arg0: i32, %arg1: i32) -> (i32, i32, i32) {
    %c0_i32 = arith.constant 0 : i32
    %c0_i32_0 = arith.constant 0 : i32
    %c0_i32_1 = arith.constant 0 : i32
    return %arg0, %c0_i32, %c0_i32_0 : i32, i32, i32
  }
  func.func @transform_3(%arg0: i32, %arg1: i32) -> (i32, i32, i32) {
    %c0_i32 = arith.constant 0 : i32
    %c0_i32_0 = arith.constant 0 : i32
    return %arg0, %arg1, %c0_i32 : i32, i32, i32
  }
  func.func @transform_4(%arg0: i32, %arg1: i32) -> (i32, i32) {
    %c0_i32 = arith.constant 0 : i32
    %c0_i32_0 = arith.constant 0 : i32
    %c0_i32_1 = arith.constant 0 : i32
    return %c0_i32, %c0_i32_0 : i32, i32
  }
  func.func @transform_5(%arg0: i32, %arg1: i32) -> (i32, i32, i32) {
    %c0_i32 = arith.constant 0 : i32
    %c0_i32_0 = arith.constant 0 : i32
    return %arg0, %arg1, %c0_i32 : i32, i32, i32
  }
  func.func @transform_6(%arg0: i32, %arg1: i32) -> (i32, i32, i32) {
    %c0_i32 = arith.constant 0 : i32
    %c0_i32_0 = arith.constant 0 : i32
    return %arg0, %arg1, %c0_i32 : i32, i32, i32
  }
}

</mosaic_0001>

<llo_original>
// kernel: tpu_custom_call.1
$region0: #{tpu_custom_call.1}
  #allocation0 [shape = 'u32[]', space=smem, size = 0x4, offset = 0x4, fixed_abs, tag = 'smem constant byte address 0x4 - core index']
  #allocation1 [shape = 'u32[72,128]{1,0:T(1,128)}', space=vmem, size = 0x9000, scoped, tag = 'internal scratch']
  %s0 = inlined_call_operand.hbm [shape: f32[2,8,32], index: 0, kind: input, shape index: {}]
  %s1 = inlined_call_operand.hbm [shape: f32[2,8,32], index: 1, kind: input, shape index: {}]
  %s2 = inlined_call_operand.hbm [shape: f32[2,8,32], index: 2, kind: input, shape index: {}]
  %s3 = inlined_call_operand.hbm [shape: s8[2,8,8], index: 3, kind: input, shape index: {}]
  %s4 = inlined_call_operand.hbm [shape: f32[32,32], index: 4, kind: input, shape index: {}]
  %s5 = inlined_call_operand.hbm [shape: f32[2,8,32], index: 5, kind: output, shape index: {0}]
  %s6 = inlined_call_operand.hbm [shape: f32[2,8,8], index: 6, kind: output, shape index: {1}]
  %7 = xla_tuple %s5, %s6
  %s8 = sld [smem:[#allocation0]]
  $region81: #{tpu_custom_call.1} parent=0
    _
  %s10 = ssub.s32 1, %s8
  %s11 = scalar_select 0, %s10, %s8
  $region1: #{tpu_custom_call.1} parent=0
    #allocation2 [shape = 'u8[8192]{0}', space=vmem, size = 0x2000, scoped, tag = 'input window, operand 0']
    #allocation3 [shape = 's32[2]{0}', space=sflag, size = 0x8, scoped, tag = 'scoped memory for tpu_custom_call.1']
    #allocation4 [shape = 's32[2]{0}', space=sflag, size = 0x8, scoped, tag = 'scoped memory for tpu_custom_call.1']
    #allocation5 [shape = 'u8[8192]{0}', space=vmem, size = 0x2000, scoped, tag = 'input window, operand 1']
    #allocation6 [shape = 's32[2]{0}', space=sflag, size = 0x8, scoped, tag = 'scoped memory for tpu_custom_call.1']
    #allocation7 [shape = 'u8[8192]{0}', space=vmem, size = 0x2000, scoped, tag = 'input window, operand 2']
    #allocation8 [shape = 'u8[2048]{0}', space=vmem, size = 0x800, scoped, tag = 'input window, operand 3']
    #allocation9 [shape = 's32[2]{0}', space=sflag, size = 0x8, scoped, tag = 'scoped memory for tpu_custom_call.1']
    #allocation10 [shape = 'u8[16384]{0}', space=vmem, size = 0x4000, scoped, tag = 'input window, operand 4, single buffered']
    #allocation11 [shape = 'u8[8192]{0}', space=vmem, size = 0x2000, scoped, tag = 'output window, operand 0']
    #allocation12 [shape = 'u8[8192]{0}', space=vmem, size = 0x2000, scoped, tag = 'output window, operand 1']
    #allocation13 [shape = 's32[2]{0}', space=sflag, size = 0x8, scoped, tag = 'scoped memory for tpu_custom_call.1']
    %12 = vsyncpa [#allocation3], 0
    %s13 = scalar_lea.sflag [#allocation3], 1
    %14 = vsyncpa %s13, 0
    %15 = vsyncpa [#allocation6], 0
    %s16 = scalar_lea.sflag [#allocation6], 1
    %17 = vsyncpa %s16, 0
    %18 = vsyncpa [#allocation9], 0
    %s19 = scalar_lea.sflag [#allocation9], 1
    %20 = vsyncpa %s19, 0
    %21 = vsyncpa [#allocation4], 0
    %s22 = scalar_lea.sflag [#allocation4], 1
    %23 = vsyncpa %s22, 0
    %24 = vsyncpa [#allocation13], 0
    %s25 = scalar_lea.sflag [#allocation13], 1
    %26 = vsyncpa %s25, 0
    loop: start=0, step=1, limit=4
    $region2: #{tpu_custom_call.1} parent=1 // loop_pre_header
      _
    $region3: #{tpu_custom_call.1} parent=1 // loop_header
      %s28 = sphi 0, %s32
      %p29 = scmp.ge.s32.totalorder %s28, 4
      %s35 = sphi 0, %s47
      %s36 = sphi 0, %s43
      %s37 = sphi 0, %s35
      %s38 = sphi 0, %s36
      %s39 = sphi 0, %s37
      %s40 = sphi 0, %s38
      %s52 = sphi 0, %s54
      %s55 = sphi 0, %s52
      %s56 = sphi 0, %s55
      %s72 = sphi 0, %s56
      %s78 = sphi 0, %s80
      %s81 = sphi 0, %s78
      %s82 = sphi 0, %s81
      %s98 = sphi 0, %s82
      %s104 = sphi 0, %s106
      %s107 = sphi 0, %s104
      %s108 = sphi 0, %s107
      %s124 = sphi 0, %s108
      %s132 = sphi 0, %s134
      %s135 = sphi 0, %s132
      %s136 = sphi 0, %s135
      %s152 = sphi 0, %s136
      %s156 = sphi 0, %s156
      %s158 = sphi 0, %s156
      %s159 = sphi 0, %s158
      %s173 = sphi 0, %s159
      %s181 = sphi 0, %s183
      %s184 = sphi 0, %s181
      %s185 = sphi 0, %s184
      %s201 = sphi 0, %s185
      %s209 = sphi 0, %s211
      %s212 = sphi 0, %s209
      %s213 = sphi 0, %s212
      %s229 = sphi 0, %s213
    $region4: #{tpu_custom_call.1} parent=1 // loop_header_branch
      %31 = sbr.rel (%p29) target = $region8
    $region5: #{tpu_custom_call.1} parent=1 // loop_body
      %s33 = ssub.s32 %s28, 1
      %s34 = ssub.s32 %s28, 2
      %s41 = sadd.s32 1, %s36
      %p42 = scmp.ge.s32.totalorder %s41, 1
      %s43 = scalar_select %p42, 0, %s41
      %s44 = sadd.s32 1, %s35
      %s45 = scalar_select %p42, %s44, %s35
      %p46 = scmp.ge.s32.totalorder %s45, 2
      %s47 = scalar_select %p46, 0, %s45
      %s48 = ssub.s32 %s35, %s47
      %s49 = ssub.s32 %s36, %s43
      %s50 = sor.u32 %s48, %s49
      %p51 = scmp.eq.s32.totalorder %s50, 0
      %s53 = sadd.s32 %s52, 1
      %s54 = scalar_select %p51, %s52, %s53
      %p57 = pneg %p51
      %p58 = scmp.eq.s32.totalorder %s28, 1
      %p59 = por %p57, %p58
      %p60 = scmp.ne.s32.totalorder %s52, %s55
      %p61 = scmp.eq.s32.totalorder %s28, 0
      %p62 = por %p60, %p61
      %p63 = scmp.ne.s32.totalorder %s52, %s55
      %p64 = scmp.eq.s32.totalorder %s33, 1
      %p65 = por %p63, %p64
      %p66 = scmp.ne.s32.totalorder %s55, %s56
      %p67 = scmp.eq.s32.totalorder %s33, 0
      %p68 = por %p66, %p67
      %p69 = scmp.ne.s32.totalorder %s55, %s56
      %p70 = scmp.eq.s32.totalorder %s34, 1
      %p71 = por %p69, %p70
      %p73 = scmp.ne.s32.totalorder %s56, %s72
      %p74 = scmp.eq.s32.totalorder %s34, 0
      %p75 = por %p73, %p74
      %s76 = ssub.s32 %s35, %s47
      %p77 = scmp.eq.s32.totalorder %s76, 0
      %s79 = sadd.s32 %s78, 1
      %s80 = scalar_select %p77, %s78, %s79
      %p83 = pneg %p77
      %p84 = scmp.eq.s32.totalorder %s28, 1
      %p85 = por %p83, %p84
      %p86 = scmp.ne.s32.totalorder %s78, %s81
      %p87 = scmp.eq.s32.totalorder %s28, 0
      %p88 = por %p86, %p87
      %p89 = scmp.ne.s32.totalorder %s78, %s81
      %p90 = scmp.eq.s32.totalorder %s33, 1
      %p91 = por %p89, %p90
      %p92 = scmp.ne.s32.totalorder %s81, %s82
      %p93 = scmp.eq.s32.totalorder %s33, 0
      %p94 = por %p92, %p93
      %p95 = scmp.ne.s32.totalorder %s81, %s82
      %p96 = scmp.eq.s32.totalorder %s34, 1
      %p97 = por %p95, %p96
      %p99 = scmp.ne.s32.totalorder %s82, %s98
      %p100 = scmp.eq.s32.totalorder %s34, 0
      %p101 = por %p99, %p100
      %s102 = ssub.s32 %s35, %s47
      %p103 = scmp.eq.s32.totalorder %s102, 0
      %s105 = sadd.s32 %s104, 1
      %s106 = scalar_select %p103, %s104, %s105
      %p109 = pneg %p103
      %p110 = scmp.eq.s32.totalorder %s28, 1
      %p111 = por %p109, %p110
      %p112 = scmp.ne.s32.totalorder %s104, %s107
      %p113 = scmp.eq.s32.totalorder %s28, 0
      %p114 = por %p112, %p113
      %p115 = scmp.ne.s32.totalorder %s104, %s107
      %p116 = scmp.eq.s32.totalorder %s33, 1
      %p117 = por %p115, %p116
      %p118 = scmp.ne.s32.totalorder %s107, %s108
      %p119 = scmp.eq.s32.totalorder %s33, 0
      %p120 = por %p118, %p119
      %p121 = scmp.ne.s32.totalorder %s107, %s108
      %p122 = scmp.eq.s32.totalorder %s34, 1
      %p123 = por %p121, %p122
      %p125 = scmp.ne.s32.totalorder %s108, %s124
      %p126 = scmp.eq.s32.totalorder %s34, 0
      %p127 = por %p125, %p126
      %s128 = ssub.s32 %s35, %s47
      %s129 = ssub.s32 %s36, %s43
      %s130 = sor.u32 %s128, %s129
      %p131 = scmp.eq.s32.totalorder %s130, 0
      %s133 = sadd.s32 %s132, 1
      %s134 = scalar_select %p131, %s132, %s133
      %p137 = pneg %p131
      %p138 = scmp.eq.s32.totalorder %s28, 1
      %p139 = por %p137, %p138
      %p140 = scmp.ne.s32.totalorder %s132, %s135
      %p141 = scmp.eq.s32.totalorder %s28, 0
      %p142 = por %p140, %p141
      %p143 = scmp.ne.s32.totalorder %s132, %s135
      %p144 = scmp.eq.s32.totalorder %s33, 1
      %p145 = por %p143, %p144
      %p146 = scmp.ne.s32.totalorder %s135, %s136
      %p147 = scmp.eq.s32.totalorder %s33, 0
      %p148 = por %p146, %p147
      %p149 = scmp.ne.s32.totalorder %s135, %s136
      %p150 = scmp.eq.s32.totalorder %s34, 1
      %p151 = por %p149, %p150
      %p153 = scmp.ne.s32.totalorder %s136, %s152
      %p154 = scmp.eq.s32.totalorder %s34, 0
      %p155 = por %p153, %p154
      %s157 = sadd.s32 %s156, 1
      %p160 = scmp.eq.s32.totalorder %s28, 1
      %p161 = scmp.ne.s32.totalorder %s156, %s158
      %p162 = scmp.eq.s32.totalorder %s28, 0
      %p163 = por %p161, %p162
      %p164 = scmp.ne.s32.totalorder %s156, %s158
      %p165 = scmp.eq.s32.totalorder %s33, 1
      %p166 = por %p164, %p165
      %p167 = scmp.ne.s32.totalorder %s158, %s159
      %p168 = scmp.eq.s32.totalorder %s33, 0
      %p169 = por %p167, %p168
      %p170 = scmp.ne.s32.totalorder %s158, %s159
      %p171 = scmp.eq.s32.totalorder %s34, 1
      %p172 = por %p170, %p171
      %p174 = scmp.ne.s32.totalorder %s159, %s173
      %p175 = scmp.eq.s32.totalorder %s34, 0
      %p176 = por %p174, %p175
      %s177 = ssub.s32 %s35, %s47
      %s178 = ssub.s32 %s36, %s43
      %s179 = sor.u32 %s177, %s178
      %p180 = scmp.eq.s32.totalorder %s179, 0
      %s182 = sadd.s32 %s181, 1
      %s183 = scalar_select %p180, %s181, %s182
      %p186 = pneg %p180
      %p187 = scmp.eq.s32.totalorder %s28, 1
      %p188 = por %p186, %p187
      %p189 = scmp.ne.s32.totalorder %s181, %s184
      %p190 = scmp.eq.s32.totalorder %s28, 0
      %p191 = por %p189, %p190
      %p192 = scmp.ne.s32.totalorder %s181, %s184
      %p193 = scmp.eq.s32.totalorder %s33, 1
      %p194 = por %p192, %p193
      %p195 = scmp.ne.s32.totalorder %s184, %s185
      %p196 = scmp.eq.s32.totalorder %s33, 0
      %p197 = por %p195, %p196
      %p198 = scmp.ne.s32.totalorder %s184, %s185
      %p199 = scmp.eq.s32.totalorder %s34, 1
      %p200 = por %p198, %p199
      %p202 = scmp.ne.s32.totalorder %s185, %s201
      %p203 = scmp.eq.s32.totalorder %s34, 0
      %p204 = por %p202, %p203
      %s205 = ssub.s32 %s35, %s47
      %s206 = ssub.s32 %s36, %s43
      %s207 = sor.u32 %s205, %s206
      %p208 = scmp.eq.s32.totalorder %s207, 0
      %s210 = sadd.s32 %s209, 1
      %s211 = scalar_select %p208, %s209, %s210
      %p214 = pneg %p208
      %p215 = scmp.eq.s32.totalorder %s28, 1
      %p216 = por %p214, %p215
      %p217 = scmp.ne.s32.totalorder %s209, %s212
      %p218 = scmp.eq.s32.totalorder %s28, 0
      %p219 = por %p217, %p218
      %p220 = scmp.ne.s32.totalorder %s209, %s212
      %p221 = scmp.eq.s32.totalorder %s33, 1
      %p222 = por %p220, %p221
      %p223 = scmp.ne.s32.totalorder %s212, %s213
      %p224 = scmp.eq.s32.totalorder %s33, 0
      %p225 = por %p223, %p224
      %p226 = scmp.ne.s32.totalorder %s212, %s213
      %p227 = scmp.eq.s32.totalorder %s34, 1
      %p228 = por %p226, %p227
      %p230 = scmp.ne.s32.totalorder %s213, %s229
      %p231 = scmp.eq.s32.totalorder %s34, 0
      %p232 = por %p230, %p231
      %p233 = scmp.le.s32.totalorder 1, %s28
      %p234 = scmp.lt.s32.totalorder %s28, 3
      %p235 = pnand %p233, %p234
      %p236 = pneg %p235
      // Predicated region
      $region9: #{tpu_custom_call.1} parent=5 // pred_check
        _
      $region10: #{tpu_custom_call.1} parent=5 // pred_check_branch
        %238 = sbr.rel (%p235) target = $region12
      $region11: #{tpu_custom_call.1} parent=5 // pred_region
        %s239 = ssub.s32 %s28, 1
        // Predicated region
        $region13: #{tpu_custom_call.1} parent=11 // pred_check
          %p240 = pneg %p169
        $region14: #{tpu_custom_call.1} parent=11 // pred_check_branch
          %242 = sbr.rel (%p240) target = $region16
        $region15: #{tpu_custom_call.1} parent=11 // pred_region
          %244 = vsyncadd [#allocation9], 0
          %s245 = sshll.u32 %s4, 4
          %s246 = int_to_ptr.hbm [resolvable:$true] %s245
          %s247 = sshll.u32 [#allocation10], 4
          %s248 = int_to_ptr.vmem [resolvable:$true] %s247
          %253 = dma.hbm_to_vmem [thread:$0]  %s246, 512, %s248, [#allocation9], 128, 128, 8
        $region16: #{tpu_custom_call.1} parent=11 // pred_fallthru
          _
      $region12: #{tpu_custom_call.1} parent=5 // pred_fallthru
        _
      %p254 = scmp.lt.s32.totalorder %s28, 2
      // Predicated region
      $region17: #{tpu_custom_call.1} parent=5 // pred_check
        %p255 = pneg %p254
      $region18: #{tpu_custom_call.1} parent=5 // pred_check_branch
        %257 = sbr.rel (%p255) target = $region20
      $region19: #{tpu_custom_call.1} parent=5 // pred_region
        // Predicated region
        $region21: #{tpu_custom_call.1} parent=19 // pred_check
          %p258 = pneg %p62
        $region22: #{tpu_custom_call.1} parent=19 // pred_check_branch
          %260 = sbr.rel (%p258) target = $region24
        $region23: #{tpu_custom_call.1} parent=19 // pred_region
          %s261 = sand.u32 %s52, 1
          %s262 = scalar_lea.sflag [#allocation3], %s261
          %s263 = sand.u32 %s52, 1
          %s264 = smul.addr %s263, 8
          %s265 = scalar_lea.vmem [#allocation2], %s264
          %267 = vsyncadd %s262, 0
          %s268 = sadd.s32 %s36, %s35
          %s269 = smul.addr %s268, 8
          %s270 = scalar_lea.hbm %s0, %s269
          %s272 = sshll.u32 %s270, 4
          %s273 = int_to_ptr.hbm [resolvable:$true] %s272
          %s274 = sshll.u32 %s265, 4
          %s275 = int_to_ptr.vmem [resolvable:$true] %s274
          %277 = dma.hbm_to_vmem [thread:$0]  %s273, 128, %s275, %s262
        $region24: #{tpu_custom_call.1} parent=19 // pred_fallthru
          _
        // Predicated region
        $region25: #{tpu_custom_call.1} parent=19 // pred_check
          %p278 = pneg %p88
        $region26: #{tpu_custom_call.1} parent=19 // pred_check_branch
          %280 = sbr.rel (%p278) target = $region28
        $region27: #{tpu_custom_call.1} parent=19 // pred_region
          %s281 = sand.u32 %s28, 1
          %s282 = scalar_lea.sflag [#allocation6], %s281
          %s283 = sand.u32 %s78, 1
          %s284 = smul.addr %s283, 8
          %s285 = scalar_lea.vmem [#allocation5], %s284
          %287 = vsyncadd %s282, 0
          %s288 = smul.addr %s35, 8
          %s289 = scalar_lea.hbm %s1, %s288
          %s291 = sshll.u32 %s289, 4
          %s292 = int_to_ptr.hbm [resolvable:$true] %s291
          %s293 = sshll.u32 %s285, 4
          %s294 = int_to_ptr.vmem [resolvable:$true] %s293
          %296 = dma.hbm_to_vmem [thread:$0]  %s292, 128, %s294, %s282
        $region28: #{tpu_custom_call.1} parent=19 // pred_fallthru
          _
        // Predicated region
        $region29: #{tpu_custom_call.1} parent=19 // pred_check
          %p297 = pneg %p114
        $region30: #{tpu_custom_call.1} parent=19 // pred_check_branch
          %299 = sbr.rel (%p297) target = $region32
        $region31: #{tpu_custom_call.1} parent=19 // pred_region
          %s300 = sand.u32 %s28, 1
          %s301 = scalar_lea.sflag [#allocation6], %s300
          %s302 = sand.u32 %s104, 1
          %s303 = smul.addr %s302, 8
          %s304 = scalar_lea.vmem [#allocation7], %s303
          %306 = vsyncadd %s301, 0
          %s307 = smul.addr %s35, 8
          %s308 = scalar_lea.hbm %s2, %s307
          %s310 = sshll.u32 %s308, 4
          %s311 = int_to_ptr.hbm [resolvable:$true] %s310
          %s312 = sshll.u32 %s304, 4
          %s313 = int_to_ptr.vmem [resolvable:$true] %s312
          %315 = dma.hbm_to_vmem [thread:$0]  %s311, 128, %s313, %s301
        $region32: #{tpu_custom_call.1} parent=19 // pred_fallthru
          _
        // Predicated region
        $region33: #{tpu_custom_call.1} parent=19 // pred_check
          %p316 = pneg %p142
        $region34: #{tpu_custom_call.1} parent=19 // pred_check_branch
          %318 = sbr.rel (%p316) target = $region36
        $region35: #{tpu_custom_call.1} parent=19 // pred_region
          %s319 = sand.u32 %s28, 1
          %s320 = scalar_lea.sflag [#allocation9], %s319
          %s321 = sand.u32 %s132, 1
          %s322 = smul.addr %s321, 2
          %s323 = scalar_lea.vmem [#allocation8], %s322
          %325 = vsyncadd %s320, 0
          %s326 = sadd.s32 %s36, %s35
          %s327 = smul.addr %s326, 2
          %s328 = scalar_lea.hbm %s3, %s327
          %s330 = sshll.u32 %s328, 4
          %s331 = int_to_ptr.hbm [resolvable:$true] %s330
          %s332 = sshll.u32 %s323, 4
          %s333 = int_to_ptr.vmem [resolvable:$true] %s332
          %335 = dma.hbm_to_vmem [thread:$0]  %s331, 32, %s333, %s320
        $region36: #{tpu_custom_call.1} parent=19 // pred_fallthru
          _
      $region20: #{tpu_custom_call.1} parent=5 // pred_fallthru
        _
      %p336 = scmp.le.s32.totalorder 1, %s28
      %p337 = scmp.lt.s32.totalorder %s28, 3
      %p338 = pnand %p336, %p337
      %p339 = pneg %p338
      // Predicated region
      $region37: #{tpu_custom_call.1} parent=5 // pred_check
        _
      $region38: #{tpu_custom_call.1} parent=5 // pred_check_branch
        %341 = sbr.rel (%p338) target = $region40
      $region39: #{tpu_custom_call.1} parent=5 // pred_region
        %s342 = ssub.s32 %s28, 1
        %s343 = sand.u32 %s55, 1
        %s344 = scalar_lea.sflag [#allocation3], %s343
        %s345 = sand.u32 %s55, 1
        %s346 = smul.addr %s345, 8
        %s347 = scalar_lea.vmem [#allocation2], %s346
        // Predicated region
        $region41: #{tpu_custom_call.1} parent=39 // pred_check
          %p348 = pneg %p68
        $region42: #{tpu_custom_call.1} parent=39 // pred_check_branch
          %350 = sbr.rel (%p348) target = $region44
        $region43: #{tpu_custom_call.1} parent=39 // pred_region
          %352 = dma.done %s344, 128
        $region44: #{tpu_custom_call.1} parent=39 // pred_fallthru
          _
        %s353 = sand.u32 %s33, 1
        %s354 = scalar_lea.sflag [#allocation6], %s353
        %s355 = sand.u32 %s81, 1
        %s356 = smul.addr %s355, 8
        %s357 = scalar_lea.vmem [#allocation5], %s356
        // Predicated region
        $region45: #{tpu_custom_call.1} parent=39 // pred_check
          %p358 = pneg %p94
        $region46: #{tpu_custom_call.1} parent=39 // pred_check_branch
          %360 = sbr.rel (%p358) target = $region48
        $region47: #{tpu_custom_call.1} parent=39 // pred_region
          %362 = dma.done %s354, 128
        $region48: #{tpu_custom_call.1} parent=39 // pred_fallthru
          _
        %s363 = sand.u32 %s33, 1
        %s364 = scalar_lea.sflag [#allocation6], %s363
        %s365 = sand.u32 %s107, 1
        %s366 = smul.addr %s365, 8
        %s367 = scalar_lea.vmem [#allocation7], %s366
        // Predicated region
        $region49: #{tpu_custom_call.1} parent=39 // pred_check
          %p368 = pneg %p120
        $region50: #{tpu_custom_call.1} parent=39 // pred_check_branch
          %370 = sbr.rel (%p368) target = $region52
        $region51: #{tpu_custom_call.1} parent=39 // pred_region
          %372 = dma.done %s364, 128
        $region52: #{tpu_custom_call.1} parent=39 // pred_fallthru
          _
        %s373 = sand.u32 %s33, 1
        %s374 = scalar_lea.sflag [#allocation9], %s373
        %s375 = sand.u32 %s135, 1
        %s376 = smul.addr %s375, 2
        %s377 = scalar_lea.vmem [#allocation8], %s376
        // Predicated region
        $region53: #{tpu_custom_call.1} parent=39 // pred_check
          %p378 = pneg %p148
        $region54: #{tpu_custom_call.1} parent=39 // pred_check_branch
          %380 = sbr.rel (%p378) target = $region56
        $region55: #{tpu_custom_call.1} parent=39 // pred_region
          %382 = dma.done %s374, 32
        $region56: #{tpu_custom_call.1} parent=39 // pred_fallthru
          _
        // Predicated region
        $region57: #{tpu_custom_call.1} parent=39 // pred_check
          %p383 = pneg %p169
        $region58: #{tpu_custom_call.1} parent=39 // pred_check_branch
          %385 = sbr.rel (%p383) target = $region60
        $region59: #{tpu_custom_call.1} parent=39 // pred_region
          %387 = dma.done [#allocation9], 512
        $region60: #{tpu_custom_call.1} parent=39 // pred_fallthru
          _
        %s388 = sand.u32 %s55, 1
        %s389 = scalar_lea.sflag [#allocation3], %s388
        %s390 = sand.u32 %s55, 1
        %s391 = smul.addr %s390, 8
        %s392 = scalar_lea.vmem [#allocation2], %s391
        %p393 = pneg %p68
        %p394 = pneg %p65
        %s395 = sand.u32 %s33, 1
        %s396 = scalar_lea.sflag [#allocation6], %s395
        %s397 = sand.u32 %s81, 1
        %s398 = smul.addr %s397, 8
        %s399 = scalar_lea.vmem [#allocation5], %s398
        %p400 = pneg %p94
        %p401 = pneg %p91
        %s402 = sand.u32 %s33, 1
        %s403 = scalar_lea.sflag [#allocation6], %s402
        %s404 = sand.u32 %s107, 1
        %s405 = smul.addr %s404, 8
        %s406 = scalar_lea.vmem [#allocation7], %s405
        %p407 = pneg %p120
        %p408 = pneg %p117
        %s409 = sand.u32 %s33, 1
        %s410 = scalar_lea.sflag [#allocation9], %s409
        %s411 = sand.u32 %s135, 1
        %s412 = smul.addr %s411, 2
        %s413 = scalar_lea.vmem [#allocation8], %s412
        %p414 = pneg %p148
        %p415 = pneg %p145
        %p416 = pneg %p169
        %p417 = pneg %p166
        %p418 = pneg %p197
        %p419 = pneg %p194
        %s420 = sand.u32 %s184, 1
        %s421 = scalar_lea.sflag [#allocation4], %s420
        %s422 = sand.u32 %s184, 1
        %s423 = smul.addr %s422, 8
        %s424 = scalar_lea.vmem [#allocation11], %s423
        %p425 = pneg %p225
        %p426 = pneg %p222
        %s427 = sand.u32 %s212, 1
        %s428 = scalar_lea.sflag [#allocation13], %s427
        %s429 = sand.u32 %s212, 1
        %s430 = smul.addr %s429, 8
        %s431 = scalar_lea.vmem [#allocation12], %s430
        %v434 = vld [vmem:[%s357] sm:$0xff]
        %v435 = vld [vmem:[%s367] sm:$0xff]
        %v436 = vld [vmem:[%s347] sm:$0xff]
        %v437 = vmul.f32 %v436, 0.17677669
        %v438 = vld [vmem:[#allocation10] sm:$0xff]
        %v439 = vld [vmem:[#allocation10 + $0x8] sm:$0xff]
        %v440 = vld [vmem:[#allocation10 + $0x10] sm:$0xff]
        %v441 = vld [vmem:[#allocation10 + $0x18] sm:$0xff]
        %vm442 = vcmask 261120
        %v444 = vsel %vm442, %v437, 0
        %446 = vmatpush.msra.mxu0 0.0
        %447 = vmatpush.msra.mxu0 0.0
        %448 = vmatpush.msra.mxu0 0.0
        %449 = vmatpush.msra.mxu0 0.0
        %450 = vmatpush.msra.mxu0 0.0
        %451 = vmatpush.msra.mxu0 0.0
        %452 = vmatpush.msra.mxu0 0.0
        %453 = vmatpush.msra.mxu0 0.0
        %454 = vmatpush.msra.mxu0 0.0
        %455 = vmatpush.msra.mxu0 0.0
        %456 = vmatpush.msra.mxu0 0.0
        %457 = vmatpush.msra.mxu0 0.0
        %458 = vmatpush.msra.mxu0 %v441
        %459 = vmatpush.msra.mxu0 %v440
        %460 = vmatpush.msra.mxu0 %v439
        %461 = vmatpush.msra.mxu0 %v438
        %462 = vmatmul.f32.gmra.mxu0 %v444
        %v463 = vpop.f32.mrf.mxu0
        %v464 = vadd.f32 0.0, %v463
        %465 = vdwg.mxu0
        %v467 = vsel %vm442, %v464, 0
        %v470 = vsel %vm442, %v434, 0
        %472 = vmatpush.xpose.msra.mxu0 0.0
        %473 = vmatpush.xpose.msra.mxu0 0.0
        %474 = vmatpush.xpose.msra.mxu0 0.0
        %475 = vmatpush.xpose.msra.mxu0 0.0
        %476 = vmatpush.xpose.msra.mxu0 0.0
        %477 = vmatpush.xpose.msra.mxu0 0.0
        %478 = vmatpush.xpose.msra.mxu0 0.0
        %479 = vmatpush.xpose.msra.mxu0 0.0
        %480 = vmatpush.xpose.msra.mxu0 0.0
        %481 = vmatpush.xpose.msra.mxu0 0.0
        %482 = vmatpush.xpose.msra.mxu0 0.0
        %483 = vmatpush.xpose.msra.mxu0 0.0
        %484 = vmatpush.xpose.msra.mxu0 0.0
        %485 = vmatpush.xpose.msra.mxu0 0.0
        %486 = vmatpush.xpose.msra.mxu0 0.0
        %487 = vmatpush.xpose.msra.mxu0 %v470
        %488 = vmatmul.f32.gmra.mxu0 %v467
        %v489 = vpop.f32.mrf.mxu0
        %v490 = vadd.f32 0.0, %v489
        %491 = vdwg.mxu0
        %v492 = vld [vmem:[%s377] sm:$0x3]
        %vm493 = vnez %v492
        %v494 = vsel %vm493, 16843009, 0
        %v495 = vunpack.c.0.s8 %v494
        %vm496 = vcmp.ne.s32.totalorder %v495, 0
        %v497 = vsel %vm496, -1e+30, %v490
        %vm498 = vcmask 64512
        %v499 = vsel %vm498, %v497, -inf
        %500 = vmax.xlane.f32.xlu0 %v499
        %v501 = vpop.xlane.xlu0 %500
        %v502 = vsub.f32 %v497, %v501
        %v503 = vmul.f32 %v502, 1.442695
        %v504 = vpow.pop %v503
        %v505 = vsel %vm498, %v504, 0.0
        %506 = vadd.xlane.f32.xlu0 %v505
        %v507 = vpop.xlane.xlu0 %506
        %v508 = vrcp.pop %v507
        %v509 = vmul.f32 %v507, %v508
        %v510 = vsub.f32 1.0, %v509
        %v511 = vmul.f32 %v508, %v510
        %v512 = vadd.f32 %v508, %v511
        %vm513 = vweird.f32 %v507
        %vm514 = vweird.f32 %v508
        %vm515 = vmor %vm513, %vm514
        %v516 = vsel %vm515, %v508, %v512
        %v517 = vand.u32 2147483647, %v507
        %vm518 = vcmp.eq.f32.partialorder %v517, 8.507059e+37
        %v519 = vand.u32 %v507, 2147483648
        %v520 = vor.u32 1.1754944e-38, %v519
        %v521 = vsel %vm518, %v520, %v516
        %v522 = vmul.f32 %v504, %v521
        %523 = vst.msk [vmem:[%s431] sm:$0xff] %vm498, %v522
        %v525 = vsel %vm498, %v522, 0
        %527 = vmatpush.msra.mxu0 0.0
        %528 = vmatpush.msra.mxu0 0.0
        %529 = vmatpush.msra.mxu0 0.0
        %530 = vmatpush.msra.mxu0 0.0
        %531 = vmatpush.msra.mxu0 0.0
        %532 = vmatpush.msra.mxu0 0.0
        %533 = vmatpush.msra.mxu0 0.0
        %534 = vmatpush.msra.mxu0 0.0
        %535 = vmatpush.msra.mxu0 0.0
        %536 = vmatpush.msra.mxu0 0.0
        %537 = vmatpush.msra.mxu0 0.0
        %538 = vmatpush.msra.mxu0 0.0
        %539 = vmatpush.msra.mxu0 0.0
        %540 = vmatpush.msra.mxu0 0.0
        %541 = vmatpush.msra.mxu0 0.0
        %542 = vmatpush.msra.mxu0 %v435
        %543 = vmatmul.f32.gmra.mxu0 %v525
        %v544 = vpop.f32.mrf.mxu0
        %v545 = vadd.f32 0.0, %v544
        %546 = vdwg.mxu0
        %547 = vst.msk [vmem:[%s424] sm:$0xff] %vm442, %v545
        %s548 = sand.u32 %s184, 1
        %s549 = scalar_lea.sflag [#allocation4], %s548
        %s550 = sand.u32 %s184, 1
        %s551 = smul.addr %s550, 8
        %s552 = scalar_lea.vmem [#allocation11], %s551
        %s553 = sand.u32 %s212, 1
        %s554 = scalar_lea.sflag [#allocation13], %s553
        %s555 = sand.u32 %s212, 1
        %s556 = smul.addr %s555, 8
        %s557 = scalar_lea.vmem [#allocation12], %s556
        // Predicated region
        $region61: #{tpu_custom_call.1} parent=39 // pred_check
          %p558 = pneg %p194
        $region62: #{tpu_custom_call.1} parent=39 // pred_check_branch
          %560 = sbr.rel (%p558) target = $region64
        $region63: #{tpu_custom_call.1} parent=39 // pred_region
          %562 = vsyncadd %s549, 0
          %s563 = sadd.s32 %s38, %s37
          %s564 = smul.addr %s563, 8
          %s565 = scalar_lea.hbm %s5, %s564
          %s567 = sshll.u32 %s552, 4
          %s568 = int_to_ptr.vmem [resolvable:$true] %s567
          %s569 = sshll.u32 %s565, 4
          %s570 = int_to_ptr.hbm [resolvable:$true] %s569
          %572 = dma.vmem_to_hbm [thread:$0]  %s568, 128, %s570, %s549
        $region64: #{tpu_custom_call.1} parent=39 // pred_fallthru
          _
        // Predicated region
        $region65: #{tpu_custom_call.1} parent=39 // pred_check
          %p573 = pneg %p222
        $region66: #{tpu_custom_call.1} parent=39 // pred_check_branch
          %575 = sbr.rel (%p573) target = $region68
        $region67: #{tpu_custom_call.1} parent=39 // pred_region
          %577 = vsyncadd %s554, 0
          %s578 = sadd.s32 %s38, %s37
          %s579 = smul.addr %s578, 8
          %s580 = scalar_lea.hbm %s6, %s579
          %s582 = sshll.u32 %s557, 4
          %s583 = int_to_ptr.vmem [resolvable:$true] %s582
          %s584 = sshll.u32 %s580, 4
          %s585 = int_to_ptr.hbm [resolvable:$true] %s584
          %587 = dma.vmem_to_hbm [thread:$0]  %s583, 128, %s585, %s554
        $region68: #{tpu_custom_call.1} parent=39 // pred_fallthru
          _
      $region40: #{tpu_custom_call.1} parent=5 // pred_fallthru
        _
      %p588 = scmp.le.s32.totalorder 2, %s28
      // Predicated region
      $region69: #{tpu_custom_call.1} parent=5 // pred_check
        %p589 = pneg %p588
      $region70: #{tpu_custom_call.1} parent=5 // pred_check_branch
        %591 = sbr.rel (%p589) target = $region72
      $region71: #{tpu_custom_call.1} parent=5 // pred_region
        %s592 = ssub.s32 %s28, 2
        // Predicated region
        $region73: #{tpu_custom_call.1} parent=71 // pred_check
          %p593 = pneg %p200
        $region74: #{tpu_custom_call.1} parent=71 // pred_check_branch
          %595 = sbr.rel (%p593) target = $region76
        $region75: #{tpu_custom_call.1} parent=71 // pred_region
          %s596 = sand.u32 %s185, 1
          %s597 = scalar_lea.sflag [#allocation4], %s596
          %s598 = sand.u32 %s185, 1
          %s599 = smul.addr %s598, 8
          %s600 = scalar_lea.vmem [#allocation11], %s599
          %602 = dma.done %s597, 128
        $region76: #{tpu_custom_call.1} parent=71 // pred_fallthru
          _
        // Predicated region
        $region77: #{tpu_custom_call.1} parent=71 // pred_check
          %p603 = pneg %p228
        $region78: #{tpu_custom_call.1} parent=71 // pred_check_branch
          %605 = sbr.rel (%p603) target = $region80
        $region79: #{tpu_custom_call.1} parent=71 // pred_region
          %s606 = sand.u32 %s213, 1
          %s607 = scalar_lea.sflag [#allocation13], %s606
          %s608 = sand.u32 %s213, 1
          %s609 = smul.addr %s608, 8
          %s610 = scalar_lea.vmem [#allocation12], %s609
          %612 = dma.done %s607, 128
        $region80: #{tpu_custom_call.1} parent=71 // pred_fallthru
          _
      $region72: #{tpu_custom_call.1} parent=5 // pred_fallthru
        _
    $region6: #{tpu_custom_call.1} parent=1 // loop_footer
      %s32 = sadd.s32 1, %s28
    $region7: #{tpu_custom_call.1} parent=1 // loop_footer_branch
      %27 = sbr.rel target = $region3
    $region8: #{tpu_custom_call.1} parent=1 // loop_exit
      _
    %613 = vsyncpa [#allocation3], 1
    %s614 = scalar_lea.sflag [#allocation3], 1
    %615 = vsyncpa %s614, 1
    %616 = vsyncpa [#allocation6], 1
    %s617 = scalar_lea.sflag [#allocation6], 1
    %618 = vsyncpa %s617, 1
    %619 = vsyncpa [#allocation9], 1
    %s620 = scalar_lea.sflag [#allocation9], 1
    %621 = vsyncpa %s620, 1
    %622 = vsyncpa [#allocation4], 1
    %s623 = scalar_lea.sflag [#allocation4], 1
    %624 = vsyncpa %s623, 1
    %625 = vsyncpa [#allocation13], 1
    %s626 = scalar_lea.sflag [#allocation13], 1
    %627 = vsyncpa %s626, 1

</llo_original>
